<compile_context>
chip_gen: v5e
topology: v5e:2x2
jax: 0.10.0
libtpu: 0.0.40
codegen_flags: <defaults>
</compile_context>

<pallas_src>
import functools

import jax
import jax.numpy as jnp
from jax.experimental import pallas as pl
from jax.experimental.pallas import tpu as pltpu

IN_DIM = 400
H1_DIM = 100
H2_DIM = 50
GRL_LAMBDA = 1.0  # forward scale; gradient reversal is a backward-only effect


def _round_up(v, m):
    return ((v + m - 1) // m) * m


def _mlp_kernel(x_ref, w1_ref, b1_ref, w2_ref, b2_ref, w3_ref, b3_ref, o_ref):
    c_out = o_ref.shape[-1]  # true (unpadded) number of classes

    # Layer 1: Linear(400 -> 100) + ReLU. Operand dtype = x dtype (bf16 or f32),
    # f32 accumulation on the MXU.
    h1 = jnp.dot(x_ref[...], w1_ref[...], preferred_element_type=jnp.float32)
    h1 = jnp.maximum(h1 + b1_ref[...], 0.0)

    # Layer 2: Linear(100 -> 50) + ReLU (f32 activations throughout).
    h2 = jnp.dot(h1, w2_ref[...], preferred_element_type=jnp.float32)
    h2 = jnp.maximum(h2 + b2_ref[...], 0.0)

    # Layer 3: Linear(50 -> c_pad) on a lane-dense (128-wide) padded weight,
    # then slice back to C before the store (masked vst -- store slots have
    # huge slack here, HBM bytes are what matter).
    dy = jnp.dot(h2, w3_ref[...], preferred_element_type=jnp.float32)
    dy = dy + b3_ref[...]
    o_ref[...] = dy[:, :c_out].astype(o_ref.dtype)


@functools.partial(jax.jit, static_argnames=("tb",))
def domain_net_forward(x, params, *, tb=2048):
    """x: (B, 400) in f32 or bf16. params: dict w1,b1,w2,b2,w3,b3 (weights (in, out)).

    The x tile is streamed in x's own dtype -- keep x bf16 end-to-end upstream
    to halve the dominant HBM stream (no wrapper-side cast is done here, since
    that would add an extra HBM pass and be a net loss).

    tb: batch tile (rows per grid step). 2048 fits comfortably in the explicit
        48 MiB VMEM budget on every generation; v6e users with bf16 inputs can
        bump it, v5e should not go above 2048.
    """
    w1, b1 = params["w1"], params["b1"]
    w2, b2 = params["w2"], params["b2"]
    w3, b3 = params["w3"], params["b3"]

    B = x.shape[0]
    C = w3.shape[1]

    # Fold the GRL forward scale into layer 1 (trace-time; no-op for Lambda=1.0).
    if GRL_LAMBDA != 1.0:
        w1 = w1 * GRL_LAMBDA  # (Lambda * x) @ W == x @ (Lambda * W)

    # Pad ONLY the last weight/bias to a lane-dense 128 so the third matmul is
    # lane-dense on the MXU. The kernel output itself stays unpadded (B, C).
    c_pad = max(128, _round_up(C, 128))
    if c_pad != C:
        w3 = jnp.pad(w3, ((0, 0), (0, c_pad - C)))
        b3 = jnp.pad(b3, ((0, 0), (0, c_pad - C)))

    # Only the tiny layer-1 weight follows x's dtype; everything downstream of
    # the first matmul stays f32 (activations, weights, biases).
    w1 = w1.astype(x.dtype)
    w2 = w2.astype(jnp.float32)
    w3 = w3.astype(jnp.float32)
    b1 = b1.astype(jnp.float32)
    b2 = b2.astype(jnp.float32)
    b3 = b3.astype(jnp.float32)

    # Batch tile: multiple of 8 sublanes; ensure >=2 grid steps for B > 8 so
    # dimension_semantics=("parallel",) actually uses both v7x TensorCores.
    if B > 8:
        tb_eff = min(tb, _round_up(pl.cdiv(B, 2), 8))
    else:
        tb_eff = min(tb, _round_up(max(B, 1), 8))
    tb_eff = max(tb_eff, 8)
    grid = (pl.cdiv(B, tb_eff),)

    x_itemsize = jnp.dtype(x.dtype).itemsize
    flops = 2 * B * (IN_DIM * H1_DIM + H1_DIM * H2_DIM + H2_DIM * c_pad)
    bytes_accessed = (
        B * IN_DIM * x_itemsize                                    # x read
        + IN_DIM * H1_DIM * x_itemsize                             # w1
        + (H1_DIM * H2_DIM + H2_DIM * c_pad) * 4                   # w2, w3
        + (H1_DIM + H2_DIM + c_pad) * 4                            # biases
        + B * C * 4                                                # unpadded output
    )
    cost = pl.CostEstimate(flops=flops, transcendentals=0,
                           bytes_accessed=bytes_accessed)

    def full_spec(arr):
        # Full-array block, constant index_map -> stays VMEM-resident across steps.
        return pl.BlockSpec(arr.shape, lambda i: (0, 0))

    out = pl.pallas_call(
        _mlp_kernel,
        out_shape=jax.ShapeDtypeStruct((B, C), jnp.float32),
        grid=grid,
        in_specs=[
            pl.BlockSpec((tb_eff, IN_DIM), lambda i: (i, 0)),  # streamed x tiles
            full_spec(w1), full_spec(b1),
            full_spec(w2), full_spec(b2),
            full_spec(w3), full_spec(b3),
        ],
        out_specs=pl.BlockSpec((tb_eff, C), lambda i: (i, 0)),  # unpadded output
        compiler_params=pltpu.CompilerParams(
            dimension_semantics=("parallel",),
            # Real lane-padded footprint at tb=2048/f32 is ~14-16 MiB (x tile is
            # 2048x512x4 B per buffer); 48 MiB gives headroom on every chip
            # (<= 64 MiB physical on v7x, well under 128 MiB on v5e/v6e).
            vmem_limit_bytes=48 * 1024 * 1024,
        ),
        cost_estimate=cost,
    )(x, w1, b1, w2, b2, w3, b3)

    return out


def init_params(key, C):
    """Deterministic synthetic parameters matching nn.Linear shapes.

    PyTorch nn.Linear(in, out) has weight (out, in), bias (out,). We store the
    weight transposed as (in, out) and bias as (1, out) for 2-D VMEM layout.
    """
    k1, k2, k3, k4, k5, k6 = jax.random.split(key, 6)

    def uniform_init(k, shape, fan_in):
        bound = 1.0 / (fan_in ** 0.5)
        return jax.random.uniform(k, shape, jnp.float32, -bound, bound)

    return {
        "w1": uniform_init(k1, (IN_DIM, H1_DIM), IN_DIM),
        "b1": uniform_init(k2, (1, H1_DIM), IN_DIM),
        "w2": uniform_init(k3, (H1_DIM, H2_DIM), H1_DIM),
        "b2": uniform_init(k4, (1, H2_DIM), H1_DIM),
        "w3": uniform_init(k5, (H2_DIM, C), H2_DIM),
        "b3": uniform_init(k6, (1, C), H2_DIM),
    }


def reference_forward(x, params):
    """Pure-JAX reference of the same forward for a correctness check."""
    xf = x.astype(jnp.float32)
    h = jnp.maximum(jnp.dot(xf * GRL_LAMBDA, params["w1"]) + params["b1"], 0.0)
    h = jnp.maximum(jnp.dot(h, params["w2"]) + params["b2"], 0.0)
    return jnp.dot(h, params["w3"]) + params["b3"]


if __name__ == "__main__":
    C = 4          # number of domains/classes
    B = 8          # small batch

    key = jax.random.PRNGKey(0)
    kx, kp = jax.random.split(key)

    x = jax.random.normal(kx, (B, IN_DIM), dtype=jnp.float32)
    params = init_params(kp, C)

    # f32 path: matches the JAX reference.
    out = domain_net_forward(x, params)
    out = jax.block_until_ready(out)

    ref = reference_forward(x, params)
    assert out.shape == (B, C), f"bad output shape {out.shape}"
    assert jnp.allclose(out, ref, atol=1e-4, rtol=1e-4), "mismatch vs. JAX reference"

    # bf16-input path (x supplied in bf16 end-to-end; layer-1 matmul runs bf16
    # with f32 accumulation, downstream activations stay f32).
    x_bf16 = x.astype(jnp.bfloat16)
    out_bf16 = jax.block_until_ready(domain_net_forward(x_bf16, params))
    assert out_bf16.shape == (B, C)
    assert bool(jnp.all(jnp.isfinite(out_bf16)))
    assert jnp.allclose(out_bf16, ref, atol=0.25, rtol=0.1), "bf16 path diverged"

    # Exercise a multi-step grid (B not a multiple of the tile) for coverage.
    x_big = jax.random.normal(jax.random.PRNGKey(1), (100, IN_DIM), jnp.float32)
    out_big = jax.block_until_ready(domain_net_forward(x_big, params, tb=64))
    ref_big = reference_forward(x_big, params)
    assert out_big.shape == (100, C)
    assert jnp.allclose(out_big, ref_big, atol=1e-4, rtol=1e-4), "tiled path mismatch"

    print("KERNEL_OK")
</pallas_src>

<mosaic_0001>
module attributes {stable_mosaic.version = 11 : i64} {
  func.func @_mlp_kernel(%arg0: i32, %arg1: memref<8x400xf32, #tpu.memory_space<vmem>>, %arg2: memref<400x100xf32, #tpu.memory_space<vmem>>, %arg3: memref<1x100xf32, #tpu.memory_space<vmem>>, %arg4: memref<100x50xf32, #tpu.memory_space<vmem>>, %arg5: memref<1x50xf32, #tpu.memory_space<vmem>>, %arg6: memref<50x128xf32, #tpu.memory_space<vmem>>, %arg7: memref<1x128xf32, #tpu.memory_space<vmem>>, %arg8: memref<8x4xf32, #tpu.memory_space<vmem>>) attributes {dimension_semantics = [#tpu.dimension_semantics<parallel>], iteration_bounds = array<i64: 1>, scalar_prefetch = 0 : i64, scratch_operands = 0 : i64, tpu.core_type = #tpu.core_type<tc>, window_params = [{transform_indices = @transform_0, window_bounds = array<i64: 8, 400>}, {pipeline_mode = #tpu.pipeline_mode<synchronous>, transform_indices = @transform_1, window_bounds = array<i64: 400, 100>}, {pipeline_mode = #tpu.pipeline_mode<synchronous>, transform_indices = @transform_2, window_bounds = array<i64: 1, 100>}, {pipeline_mode = #tpu.pipeline_mode<synchronous>, transform_indices = @transform_3, window_bounds = array<i64: 100, 50>}, {pipeline_mode = #tpu.pipeline_mode<synchronous>, transform_indices = @transform_4, window_bounds = array<i64: 1, 50>}, {pipeline_mode = #tpu.pipeline_mode<synchronous>, transform_indices = @transform_5, window_bounds = array<i64: 50, 128>}, {pipeline_mode = #tpu.pipeline_mode<synchronous>, transform_indices = @transform_6, window_bounds = array<i64: 1, 128>}, {transform_indices = @transform_7, window_bounds = array<i64: 8, 4>}]} {
    %c0 = arith.constant 0 : index
    %c0_0 = arith.constant 0 : index
    %0 = vector.load %arg1[%c0, %c0_0] : memref<8x400xf32, #tpu.memory_space<vmem>>, vector<8x400xf32>
    %c0_1 = arith.constant 0 : index
    %c0_2 = arith.constant 0 : index
    %1 = vector.load %arg2[%c0_1, %c0_2] : memref<400x100xf32, #tpu.memory_space<vmem>>, vector<400x100xf32>
    %cst = arith.constant dense<0.000000e+00> : vector<8x100xf32>
    %2 = tpu.matmul %0, %1, %cst {dimension_numbers = #tpu.dot_dimension_numbers<[1], [0], [0], [1], [0, 0, 1, 1], [], []>} : vector<8x400xf32>, vector<400x100xf32>, vector<8x100xf32> -> vector<8x100xf32>
    %c0_3 = arith.constant 0 : index
    %c0_4 = arith.constant 0 : index
    %3 = vector.load %arg3[%c0_3, %c0_4] : memref<1x100xf32, #tpu.memory_space<vmem>>, vector<1x100xf32>
    %4 = vector.broadcast %3 : vector<1x100xf32> to vector<8x100xf32>
    %5 = arith.addf %2, %4 : vector<8x100xf32>
    %cst_5 = arith.constant 0.000000e+00 : f32
    %6 = vector.broadcast %cst_5 : f32 to vector<8x100xf32>
    %7 = arith.maximumf %5, %6 : vector<8x100xf32>
    %c0_6 = arith.constant 0 : index
    %c0_7 = arith.constant 0 : index
    %8 = vector.load %arg4[%c0_6, %c0_7] : memref<100x50xf32, #tpu.memory_space<vmem>>, vector<100x50xf32>
    %cst_8 = arith.constant dense<0.000000e+00> : vector<8x50xf32>
    %9 = tpu.matmul %7, %8, %cst_8 {dimension_numbers = #tpu.dot_dimension_numbers<[1], [0], [0], [1], [0, 0, 1, 1], [], []>} : vector<8x100xf32>, vector<100x50xf32>, vector<8x50xf32> -> vector<8x50xf32>
    %c0_9 = arith.constant 0 : index
    %c0_10 = arith.constant 0 : index
    %10 = vector.load %arg5[%c0_9, %c0_10] : memref<1x50xf32, #tpu.memory_space<vmem>>, vector<1x50xf32>
    %11 = vector.broadcast %10 : vector<1x50xf32> to vector<8x50xf32>
    %12 = arith.addf %9, %11 : vector<8x50xf32>
    %cst_11 = arith.constant 0.000000e+00 : f32
    %13 = vector.broadcast %cst_11 : f32 to vector<8x50xf32>
    %14 = arith.maximumf %12, %13 : vector<8x50xf32>
    %c0_12 = arith.constant 0 : index
    %c0_13 = arith.constant 0 : index
    %15 = vector.load %arg6[%c0_12, %c0_13] : memref<50x128xf32, #tpu.memory_space<vmem>>, vector<50x128xf32>
    %cst_14 = arith.constant dense<0.000000e+00> : vector<8x128xf32>
    %16 = tpu.matmul %14, %15, %cst_14 {dimension_numbers = #tpu.dot_dimension_numbers<[1], [0], [0], [1], [0, 0, 1, 1], [], []>} : vector<8x50xf32>, vector<50x128xf32>, vector<8x128xf32> -> vector<8x128xf32>
    %c0_15 = arith.constant 0 : index
    %c0_16 = arith.constant 0 : index
    %17 = vector.load %arg7[%c0_15, %c0_16] : memref<1x128xf32, #tpu.memory_space<vmem>>, vector<1x128xf32>
    %18 = vector.broadcast %17 : vector<1x128xf32> to vector<8x128xf32>
    %19 = arith.addf %16, %18 : vector<8x128xf32>
    %20 = vector.extract_strided_slice %19 {offsets = [0, 0], sizes = [8, 4], strides = [1, 1]} : vector<8x128xf32> to vector<8x4xf32>
    %c0_17 = arith.constant 0 : index
    %c0_18 = arith.constant 0 : index
    %21 = vector.load %arg8[%c0_17, %c0_18] : memref<8x4xf32, #tpu.memory_space<vmem>>, vector<8x4xf32>
    tpu.vector_store %arg8[%c0_17, %c0_18], %20 {strides = array<i32>} : memref<8x4xf32, #tpu.memory_space<vmem>>, vector<8x4xf32>,
    return
  }
  func.func @transform_0(%arg0: i32) -> (i32, i32) {
    %c0_i32 = arith.constant 0 : i32
    %c0_i32_0 = arith.constant 0 : i32
    return %arg0, %c0_i32 : i32, i32
  }
  func.func @transform_1(%arg0: i32) -> (i32, i32) {
    %c0_i32 = arith.constant 0 : i32
    %c0_i32_0 = arith.constant 0 : i32
    %c0_i32_1 = arith.constant 0 : i32
    return %c0_i32, %c0_i32_0 : i32, i32
  }
  func.func @transform_2(%arg0: i32) -> (i32, i32) {
    %c0_i32 = arith.constant 0 : i32
    %c0_i32_0 = arith.constant 0 : i32
    %c0_i32_1 = arith.constant 0 : i32
    return %c0_i32, %c0_i32_0 : i32, i32
  }
  func.func @transform_3(%arg0: i32) -> (i32, i32) {
    %c0_i32 = arith.constant 0 : i32
    %c0_i32_0 = arith.constant 0 : i32
    %c0_i32_1 = arith.constant 0 : i32
    return %c0_i32, %c0_i32_0 : i32, i32
  }
  func.func @transform_4(%arg0: i32) -> (i32, i32) {
    %c0_i32 = arith.constant 0 : i32
    %c0_i32_0 = arith.constant 0 : i32
    %c0_i32_1 = arith.constant 0 : i32
    return %c0_i32, %c0_i32_0 : i32, i32
  }
  func.func @transform_5(%arg0: i32) -> (i32, i32) {
    %c0_i32 = arith.constant 0 : i32
    %c0_i32_0 = arith.constant 0 : i32
    %c0_i32_1 = arith.constant 0 : i32
    return %c0_i32, %c0_i32_0 : i32, i32
  }
  func.func @transform_6(%arg0: i32) -> (i32, i32) {
    %c0_i32 = arith.constant 0 : i32
    %c0_i32_0 = arith.constant 0 : i32
    %c0_i32_1 = arith.constant 0 : i32
    return %c0_i32, %c0_i32_0 : i32, i32
  }
  func.func @transform_7(%arg0: i32) -> (i32, i32) {
    %c0_i32 = arith.constant 0 : i32
    %c0_i32_0 = arith.constant 0 : i32
    return %arg0, %c0_i32 : i32, i32
  }
}

</mosaic_0001>

<llo_original>
// kernel: domain_net_forward.1
$region0: #{domain_net_forward.1}
  #allocation0 [shape = 'u32[]', space=smem, size = 0x4, offset = 0x4, fixed_abs, tag = 'smem constant byte address 0x4 - core index']
  #allocation1 [shape = 'u32[72,128]{1,0:T(1,128)}', space=vmem, size = 0x9000, scoped, tag = 'internal scratch']
  %s0 = inlined_call_operand.vmem [shape: f32[8,400], index: 0, kind: input, shape index: {}]
  %s1 = inlined_call_operand.hbm [shape: f32[400,100], index: 1, kind: input, shape index: {}]
  %s2 = inlined_call_operand.vmem [shape: f32[1,100], index: 2, kind: input, shape index: {}]
  %s3 = inlined_call_operand.vmem [shape: f32[100,50], index: 3, kind: input, shape index: {}]
  %s4 = inlined_call_operand.vmem [shape: f32[1,50], index: 4, kind: input, shape index: {}]
  %s5 = inlined_call_operand.vmem [shape: f32[50,128], index: 5, kind: input, shape index: {}]
  %s6 = inlined_call_operand.vmem [shape: f32[1,128], index: 6, kind: input, shape index: {}]
  %s7 = inlined_call_operand.vmem [shape: f32[8,4], index: 7, kind: output, shape index: {}]
  %s8 = sld [smem:[#allocation0]]
  $region42: #{domain_net_forward.1} parent=0
    _
  %s10 = ssub.s32 1, %s8
  %s11 = scalar_select 0, %s10, %s8
  $region1: #{domain_net_forward.1} parent=0
    #allocation2 [shape = 'u8[204800]{0}', space=vmem, size = 0x32000, scoped, tag = 'input window, operand 1, single buffered']
    #allocation3 [shape = 's32[1]{0}', space=sflag, size = 0x4, scoped, tag = 'scoped memory for domain_net_forward.1']
    %12 = vsyncpa [#allocation3], 0
    // Predicated region
    $region2: #{domain_net_forward.1} parent=1 // pred_check
      _
    $region3: #{domain_net_forward.1} parent=1 // pred_check_branch
      %14 = sbr.rel (0) target = $region5
    $region4: #{domain_net_forward.1} parent=1 // pred_region
      _
    $region5: #{domain_net_forward.1} parent=1 // pred_fallthru
      _
    // Predicated region
    $region6: #{domain_net_forward.1} parent=1 // pred_check
      _
    $region7: #{domain_net_forward.1} parent=1 // pred_check_branch
      %16 = sbr.rel (0) target = $region9
    $region8: #{domain_net_forward.1} parent=1 // pred_region
      %18 = vsyncadd [#allocation3], 0
      %s19 = sshll.u32 %s1, 4
      %s20 = int_to_ptr.hbm [resolvable:$true] %s19
      %s21 = sshll.u32 [#allocation2], 4
      %s22 = int_to_ptr.vmem [resolvable:$true] %s21
      %27 = dma.hbm_to_vmem [thread:$0]  %s20, 6400, %s22, [#allocation3], 128, 128, 8
    $region9: #{domain_net_forward.1} parent=1 // pred_fallthru
      _
    // Predicated region
    $region10: #{domain_net_forward.1} parent=1 // pred_check
      _
    $region11: #{domain_net_forward.1} parent=1 // pred_check_branch
      %29 = sbr.rel (0) target = $region13
    $region12: #{domain_net_forward.1} parent=1 // pred_region
      _
    $region13: #{domain_net_forward.1} parent=1 // pred_fallthru
      _
    // Predicated region
    $region14: #{domain_net_forward.1} parent=1 // pred_check
      _
    $region15: #{domain_net_forward.1} parent=1 // pred_check_branch
      %31 = sbr.rel (0) target = $region17
    $region16: #{domain_net_forward.1} parent=1 // pred_region
      _
    $region17: #{domain_net_forward.1} parent=1 // pred_fallthru
      _
    // Predicated region
    $region18: #{domain_net_forward.1} parent=1 // pred_check
      _
    $region19: #{domain_net_forward.1} parent=1 // pred_check_branch
      %33 = sbr.rel (0) target = $region21
    $region20: #{domain_net_forward.1} parent=1 // pred_region
      _
    $region21: #{domain_net_forward.1} parent=1 // pred_fallthru
      _
    // Predicated region
    $region22: #{domain_net_forward.1} parent=1 // pred_check
      _
    $region23: #{domain_net_forward.1} parent=1 // pred_check_branch
      %35 = sbr.rel (0) target = $region25
    $region24: #{domain_net_forward.1} parent=1 // pred_region
      _
    $region25: #{domain_net_forward.1} parent=1 // pred_fallthru
      _
    // Predicated region
    $region26: #{domain_net_forward.1} parent=1 // pred_check
      _
    $region27: #{domain_net_forward.1} parent=1 // pred_check_branch
      %37 = sbr.rel (0) target = $region29
    $region28: #{domain_net_forward.1} parent=1 // pred_region
      _
    $region29: #{domain_net_forward.1} parent=1 // pred_fallthru
      _
    // Predicated region
    $region30: #{domain_net_forward.1} parent=1 // pred_check
      _
    $region31: #{domain_net_forward.1} parent=1 // pred_check_branch
      %39 = sbr.rel (0) target = $region33
    $region32: #{domain_net_forward.1} parent=1 // pred_region
      %41 = dma.done [#allocation3], 6400
    $region33: #{domain_net_forward.1} parent=1 // pred_fallthru
      _
    %v42 = vld [vmem:[%s0] sm:$0xff]
    %v43 = vld [vmem:[%s0 + $0x8] sm:$0xff]
    %v44 = vld [vmem:[%s0 + $0x10] sm:$0xff]
    %v45 = vld [vmem:[%s0 + $0x18] sm:$0xff]
    %v46 = vld [vmem:[#allocation2] sm:$0xff]
    %v47 = vld [vmem:[#allocation2 + $0x8] sm:$0xff]
    %v48 = vld [vmem:[#allocation2 + $0x10] sm:$0xff]
    %v49 = vld [vmem:[#allocation2 + $0x18] sm:$0xff]
    %v50 = vld [vmem:[#allocation2 + $0x20] sm:$0xff]
    %v51 = vld [vmem:[#allocation2 + $0x28] sm:$0xff]
    %v52 = vld [vmem:[#allocation2 + $0x30] sm:$0xff]
    %v53 = vld [vmem:[#allocation2 + $0x38] sm:$0xff]
    %v54 = vld [vmem:[#allocation2 + $0x40] sm:$0xff]
    %v55 = vld [vmem:[#allocation2 + $0x48] sm:$0xff]
    %v56 = vld [vmem:[#allocation2 + $0x50] sm:$0xff]
    %v57 = vld [vmem:[#allocation2 + $0x58] sm:$0xff]
    %v58 = vld [vmem:[#allocation2 + $0x60] sm:$0xff]
    %v59 = vld [vmem:[#allocation2 + $0x68] sm:$0xff]
    %v60 = vld [vmem:[#allocation2 + $0x70] sm:$0xff]
    %v61 = vld [vmem:[#allocation2 + $0x78] sm:$0xff]
    %v62 = vld [vmem:[#allocation2 + $0x80] sm:$0xff]
    %v63 = vld [vmem:[#allocation2 + $0x88] sm:$0xff]
    %v64 = vld [vmem:[#allocation2 + $0x90] sm:$0xff]
    %v65 = vld [vmem:[#allocation2 + $0x98] sm:$0xff]
    %v66 = vld [vmem:[#allocation2 + $0xa0] sm:$0xff]
    %v67 = vld [vmem:[#allocation2 + $0xa8] sm:$0xff]
    %v68 = vld [vmem:[#allocation2 + $0xb0] sm:$0xff]
    %v69 = vld [vmem:[#allocation2 + $0xb8] sm:$0xff]
    %v70 = vld [vmem:[#allocation2 + $0xc0] sm:$0xff]
    %v71 = vld [vmem:[#allocation2 + $0xc8] sm:$0xff]
    %v72 = vld [vmem:[#allocation2 + $0xd0] sm:$0xff]
    %v73 = vld [vmem:[#allocation2 + $0xd8] sm:$0xff]
    %v74 = vld [vmem:[#allocation2 + $0xe0] sm:$0xff]
    %v75 = vld [vmem:[#allocation2 + $0xe8] sm:$0xff]
    %v76 = vld [vmem:[#allocation2 + $0xf0] sm:$0xff]
    %v77 = vld [vmem:[#allocation2 + $0xf8] sm:$0xff]
    %v78 = vld [vmem:[#allocation2 + $0x100] sm:$0xff]
    %v79 = vld [vmem:[#allocation2 + $0x108] sm:$0xff]
    %v80 = vld [vmem:[#allocation2 + $0x110] sm:$0xff]
    %v81 = vld [vmem:[#allocation2 + $0x118] sm:$0xff]
    %v82 = vld [vmem:[#allocation2 + $0x120] sm:$0xff]
    %v83 = vld [vmem:[#allocation2 + $0x128] sm:$0xff]
    %v84 = vld [vmem:[#allocation2 + $0x130] sm:$0xff]
    %v85 = vld [vmem:[#allocation2 + $0x138] sm:$0xff]
    %v86 = vld [vmem:[#allocation2 + $0x140] sm:$0xff]
    %v87 = vld [vmem:[#allocation2 + $0x148] sm:$0xff]
    %v88 = vld [vmem:[#allocation2 + $0x150] sm:$0xff]
    %v89 = vld [vmem:[#allocation2 + $0x158] sm:$0xff]
    %v90 = vld [vmem:[#allocation2 + $0x160] sm:$0xff]
    %v91 = vld [vmem:[#allocation2 + $0x168] sm:$0xff]
    %v92 = vld [vmem:[#allocation2 + $0x170] sm:$0xff]
    %v93 = vld [vmem:[#allocation2 + $0x178] sm:$0xff]
    %v94 = vld [vmem:[#allocation2 + $0x180] sm:$0xff]
    %v95 = vld [vmem:[#allocation2 + $0x188] sm:$0xff]
    %v96 = vld [vmem:[%s2] sm:$0x1]
    %v98 = vperm.slane %v96, 0
    %vm100 = vcmask 130048
    %v102 = vsel %vm100, %v45, 0
    %104 = vmatpush.msra.mxu0 %v61
    %105 = vmatpush.msra.mxu0 %v60
    %106 = vmatpush.msra.mxu0 %v59
    %107 = vmatpush.msra.mxu0 %v58
    %108 = vmatpush.msra.mxu0 %v57
    %109 = vmatpush.msra.mxu0 %v56
    %110 = vmatpush.msra.mxu0 %v55
    %111 = vmatpush.msra.mxu0 %v54
    %112 = vmatpush.msra.mxu0 %v53
    %113 = vmatpush.msra.mxu0 %v52
    %114 = vmatpush.msra.mxu0 %v51
    %115 = vmatpush.msra.mxu0 %v50
    %116 = vmatpush.msra.mxu0 %v49
    %117 = vmatpush.msra.mxu0 %v48
    %118 = vmatpush.msra.mxu0 %v47
    %119 = vmatpush.msra.mxu0 %v46
    %120 = vmatmul.f32.gmra.mxu0 %v42
    %v121 = vpop.f32.mrf.mxu0
    %v122 = vadd.f32 %v98, %v121
    %123 = vdwg.mxu0
    %124 = vmatpush.msra.mxu0 %v77
    %125 = vmatpush.msra.mxu0 %v76
    %126 = vmatpush.msra.mxu0 %v75
    %127 = vmatpush.msra.mxu0 %v74
    %128 = vmatpush.msra.mxu0 %v73
    %129 = vmatpush.msra.mxu0 %v72
    %130 = vmatpush.msra.mxu0 %v71
    %131 = vmatpush.msra.mxu0 %v70
    %132 = vmatpush.msra.mxu0 %v69
    %133 = vmatpush.msra.mxu0 %v68
    %134 = vmatpush.msra.mxu0 %v67
    %135 = vmatpush.msra.mxu0 %v66
    %136 = vmatpush.msra.mxu0 %v65
    %137 = vmatpush.msra.mxu0 %v64
    %138 = vmatpush.msra.mxu0 %v63
    %139 = vmatpush.msra.mxu0 %v62
    %140 = vmatmul.f32.gmra.mxu0 %v43
    %v141 = vpop.f32.mrf.mxu0
    %v142 = vadd.f32 %v122, %v141
    %143 = vdwg.mxu0
    %144 = vmatpush.msra.mxu0 %v93
    %145 = vmatpush.msra.mxu0 %v92
    %146 = vmatpush.msra.mxu0 %v91
    %147 = vmatpush.msra.mxu0 %v90
    %148 = vmatpush.msra.mxu0 %v89
    %149 = vmatpush.msra.mxu0 %v88
    %150 = vmatpush.msra.mxu0 %v87
    %151 = vmatpush.msra.mxu0 %v86
    %152 = vmatpush.msra.mxu0 %v85
    %153 = vmatpush.msra.mxu0 %v84
    %154 = vmatpush.msra.mxu0 %v83
    %155 = vmatpush.msra.mxu0 %v82
    %156 = vmatpush.msra.mxu0 %v81
    %157 = vmatpush.msra.mxu0 %v80
    %158 = vmatpush.msra.mxu0 %v79
    %159 = vmatpush.msra.mxu0 %v78
    %160 = vmatmul.f32.gmra.mxu0 %v44
    %v161 = vpop.f32.mrf.mxu0
    %v162 = vadd.f32 %v142, %v161
    %163 = vdwg.mxu0
    %164 = vmatpush.msra.mxu0 0.0
    %165 = vmatpush.msra.mxu0 0.0
    %166 = vmatpush.msra.mxu0 0.0
    %167 = vmatpush.msra.mxu0 0.0
    %168 = vmatpush.msra.mxu0 0.0
    %169 = vmatpush.msra.mxu0 0.0
    %170 = vmatpush.msra.mxu0 0.0
    %171 = vmatpush.msra.mxu0 0.0
    %172 = vmatpush.msra.mxu0 0.0
    %173 = vmatpush.msra.mxu0 0.0
    %174 = vmatpush.msra.mxu0 0.0
    %175 = vmatpush.msra.mxu0 0.0
    %176 = vmatpush.msra.mxu0 0.0
    %177 = vmatpush.msra.mxu0 0.0
    %178 = vmatpush.msra.mxu0 %v95
    %179 = vmatpush.msra.mxu0 %v94
    %180 = vmatmul.f32.gmra.mxu0 %v102
    %v181 = vpop.f32.mrf.mxu0
    %v182 = vadd.f32 %v162, %v181
    %183 = vdwg.mxu0
    %v184 = vmax.f32 %v182, 0.0
    %v185 = vld [vmem:[%s3] sm:$0xff]
    %v186 = vld [vmem:[%s3 + $0x8] sm:$0xff]
    %v187 = vld [vmem:[%s3 + $0x10] sm:$0xff]
    %v188 = vld [vmem:[%s3 + $0x18] sm:$0xff]
    %v189 = vld [vmem:[%s3 + $0x20] sm:$0xff]
    %v190 = vld [vmem:[%s3 + $0x28] sm:$0xff]
    %v191 = vld [vmem:[%s3 + $0x30] sm:$0xff]
    %v192 = vld [vmem:[%s3 + $0x38] sm:$0xff]
    %v193 = vld [vmem:[%s3 + $0x40] sm:$0xff]
    %v194 = vld [vmem:[%s3 + $0x48] sm:$0xff]
    %v195 = vld [vmem:[%s3 + $0x50] sm:$0xff]
    %v196 = vld [vmem:[%s3 + $0x58] sm:$0xff]
    %v197 = vld [vmem:[%s3 + $0x60] sm:$0xf]
    %v198 = vld [vmem:[%s4] sm:$0x1]
    %v200 = vperm.slane %v198, 0
    %vm202 = vcmask 818176
    %v204 = vsel %vm202, %v184, 0
    %vm206 = vcmask 1043456
    %v208 = vsel %vm206, %v197, 0
    %210 = vmatpush.msra.mxu0 0.0
    %211 = vmatpush.msra.mxu0 0.0
    %212 = vmatpush.msra.mxu0 0.0
    %213 = vmatpush.msra.mxu0 %v208
    %214 = vmatpush.msra.mxu0 %v196
    %215 = vmatpush.msra.mxu0 %v195
    %216 = vmatpush.msra.mxu0 %v194
    %217 = vmatpush.msra.mxu0 %v193
    %218 = vmatpush.msra.mxu0 %v192
    %219 = vmatpush.msra.mxu0 %v191
    %220 = vmatpush.msra.mxu0 %v190
    %221 = vmatpush.msra.mxu0 %v189
    %222 = vmatpush.msra.mxu0 %v188
    %223 = vmatpush.msra.mxu0 %v187
    %224 = vmatpush.msra.mxu0 %v186
    %225 = vmatpush.msra.mxu0 %v185
    %226 = vmatmul.f32.gmra.mxu0 %v204
    %v227 = vpop.f32.mrf.mxu0
    %v228 = vadd.f32 %v200, %v227
    %229 = vdwg.mxu0
    %v230 = vmax.f32 %v228, 0.0
    %v231 = vld [vmem:[%s5] sm:$0xff]
    %v232 = vld [vmem:[%s5 + $0x8] sm:$0xff]
    %v233 = vld [vmem:[%s5 + $0x10] sm:$0xff]
    %v234 = vld [vmem:[%s5 + $0x18] sm:$0xff]
    %v235 = vld [vmem:[%s5 + $0x20] sm:$0xff]
    %v236 = vld [vmem:[%s5 + $0x28] sm:$0xff]
    %v237 = vld [vmem:[%s5 + $0x30] sm:$0x3]
    %v238 = vld [vmem:[%s6] sm:$0x1]
    %v240 = vperm.slane %v238, 0
    %vm242 = vcmask 408576
    %v244 = vsel %vm242, %v230, 0
    %vm246 = vcmask 1041408
    %v248 = vsel %vm246, %v237, 0
    %250 = vmatpush.msra.mxu0 0.0
    %251 = vmatpush.msra.mxu0 0.0
    %252 = vmatpush.msra.mxu0 0.0
    %253 = vmatpush.msra.mxu0 0.0
    %254 = vmatpush.msra.mxu0 0.0
    %255 = vmatpush.msra.mxu0 0.0
    %256 = vmatpush.msra.mxu0 0.0
    %257 = vmatpush.msra.mxu0 0.0
    %258 = vmatpush.msra.mxu0 0.0
    %259 = vmatpush.msra.mxu0 %v248
    %260 = vmatpush.msra.mxu0 %v236
    %261 = vmatpush.msra.mxu0 %v235
    %262 = vmatpush.msra.mxu0 %v234
    %263 = vmatpush.msra.mxu0 %v233
    %264 = vmatpush.msra.mxu0 %v232
    %265 = vmatpush.msra.mxu0 %v231
    %266 = vmatmul.f32.gmra.mxu0 %v244
    %v267 = vpop.f32.mrf.mxu0
    %v268 = vadd.f32 %v240, %v267
    %269 = vdwg.mxu0
    %vm270 = vcmask 31744
    %271 = vst.msk [vmem:[%s7] sm:$0xff] %vm270, %v268
    // Predicated region
    $region34: #{domain_net_forward.1} parent=1 // pred_check
      _
    $region35: #{domain_net_forward.1} parent=1 // pred_check_branch
      %273 = sbr.rel (0) target = $region37
    $region36: #{domain_net_forward.1} parent=1 // pred_region
      _
    $region37: #{domain_net_forward.1} parent=1 // pred_fallthru
      _
    // Predicated region
    $region38: #{domain_net_forward.1} parent=1 // pred_check
      _
    $region39: #{domain_net_forward.1} parent=1 // pred_check_branch
      %275 = sbr.rel (0) target = $region41
    $region40: #{domain_net_forward.1} parent=1 // pred_region
      _
    $region41: #{domain_net_forward.1} parent=1 // pred_fallthru
      _
    %276 = vsyncpa [#allocation3], 1

</llo_original>
